<compile_context>
chip_gen: v7x
topology: tpu7x:2x2x1
jax: 0.10.0
libtpu: 0.0.40
codegen_flags: <defaults>
</compile_context>

<pallas_src>
import numpy as np
import jax
import jax.numpy as jnp
from jax import lax
from jax.experimental import pallas as pl
from jax.experimental.pallas import tpu as pltpu


def _round_up(x, m):
    return ((x + m - 1) // m) * m


def _simple_unit_kernel(cnn_ref, kg_ref, w_ref, b_ref, out_ref):
    # cnn_ref, kg_ref: (tm, D)
    # w_ref:           (tn, 2D)   torch nn.Linear (out, in) layout, untransposed
    # b_ref:           (1, tn)
    # Fuse the concat in VMEM, then one K=2D NT matmul on the MXU (f32 acc).
    x = jnp.concatenate([cnn_ref[...], kg_ref[...]], axis=1)          # (tm, 2D)
    acc = lax.dot_general(
        x, w_ref[...],
        dimension_numbers=(((1,), (1,)), ((), ())),                    # x @ w.T
        preferred_element_type=jnp.float32)                            # (tm, tn)
    acc = acc + b_ref[...].astype(jnp.float32)
    out_ref[...] = acc.astype(out_ref.dtype)


def simple_unit(drug_cnn, drug_kg, weight, bias, *, block_rows=256, block_cols=512):
    """SimpleUnit forward.

    drug_cnn, drug_kg : (B, D)
    weight            : (D, 2*D)  -- torch nn.Linear layout (out, in), NOT transposed
    bias              : (D,)
    Returns (out, out) with out of shape (B, D), matching the torch module.
    """
    B, D = drug_cnn.shape
    assert drug_kg.shape == (B, D)
    assert weight.shape == (D, 2 * D)
    assert bias.shape == (D,)

    b2d = bias.reshape(1, D)                      # trivial; no weight copies here

    a_esz = drug_cnn.dtype.itemsize
    w_esz = weight.dtype.itemsize
    o_esz = drug_cnn.dtype.itemsize

    block_rows = _round_up(max(8, block_rows), 8)
    block_cols = _round_up(max(128, block_cols), 128)

    # Generation-aware VMEM budget (v5e/v6e: 128 MiB physical, v7x: 64 MiB).
    try:
        vmem_cap = int(pltpu.get_tpu_info().vmem_capacity_bytes)
    except Exception:
        vmem_cap = 64 * 1024 * 1024               # conservative fallback
    if vmem_cap >= 128 * 1024 * 1024:
        vmem_limit = 96 * 1024 * 1024             # v5e / v6e: go big
        if B >= 1024:
            block_rows = max(block_rows, 512)
    else:
        vmem_limit = max(32 * 1024 * 1024, (vmem_cap * 3) // 4)   # ~48 MiB on v7x
    budget = (vmem_limit * 85) // 100

    # Base tile sizes: full extent when small (always legal), else aligned blocks.
    tm = B if B <= block_rows else block_rows
    tn = D if D <= block_cols else block_cols

    # v7x megacore: make sure a "parallel" axis has >= 2 steps when B allows it.
    if B >= 16 and pl.cdiv(B, tm) * pl.cdiv(D, tn) < 2:
        tm = _round_up(pl.cdiv(B, 2), 8)

    # Whole-K (=2D) per block; shrink tiles until the double-buffered working
    # set fits the scoped VMEM limit (matters for large D on v7x's 64 MiB).
    def vmem_est(tm_, tn_):
        act = 2 * tm_ * D * a_esz                      # cnn + kg tiles
        wgt = tn_ * 2 * D * w_esz + tn_ * w_esz        # weight tile + bias tile
        out = tm_ * tn_ * o_esz
        temps = tm_ * 2 * D * a_esz + tm_ * tn_ * 4    # in-kernel concat + f32 acc
        return 2 * (act + wgt + out) + temps           # x2: double-buffered pipeline

    while vmem_est(tm, tn) > budget:
        if tn > 128:
            tn = max(128, ((tn // 2) // 128) * 128)
        elif tm > 8:
            tm = max(8, ((tm // 2) // 8) * 8)
        else:
            break                                       # huge D: would need a K grid axis

    n_i = pl.cdiv(B, tm)                                # row blocks
    n_j = pl.cdiv(D, tn)                                # output-col blocks

    # Grid ordering: keep the operand with the larger re-stream cost resident
    # (i.e. indexed only by the OUTER grid axis).
    w_bytes = 2 * D * D * w_esz
    a_bytes = 2 * B * D * a_esz
    rows_outer = w_bytes * (n_i - 1) <= a_bytes * (n_j - 1)

    if rows_outer:
        grid = (n_i, n_j)                               # weights stream (inner j)
        act_map = lambda i, j: (i, 0)
        w_map = lambda i, j: (j, 0)
        b_map = lambda i, j: (0, j)
        o_map = lambda i, j: (i, j)
    else:
        grid = (n_j, n_i)                               # weights resident, acts stream
        act_map = lambda j, i: (i, 0)
        w_map = lambda j, i: (j, 0)
        b_map = lambda j, i: (0, j)
        o_map = lambda j, i: (i, j)

    out = pl.pallas_call(
        _simple_unit_kernel,
        out_shape=jax.ShapeDtypeStruct((B, D), drug_cnn.dtype),
        grid=grid,
        in_specs=[
            pl.BlockSpec((tm, D), act_map),             # drug_cnn rows
            pl.BlockSpec((tm, D), act_map),             # drug_kg rows
            pl.BlockSpec((tn, 2 * D), w_map),           # weight rows (out-dim tiled)
            pl.BlockSpec((1, tn), b_map),               # bias cols
        ],
        out_specs=pl.BlockSpec((tm, tn), o_map),
        compiler_params=pltpu.CompilerParams(
            dimension_semantics=("parallel", "parallel"),
            vmem_limit_bytes=int(vmem_limit),
        ),
    )(drug_cnn, drug_kg, weight, b2d)

    # Torch returns the same tensor twice.
    return out, out


if __name__ == "__main__":
    D = 128    # module default input_dim
    B = 16     # small batch (>=16 so the row axis splits across TensorCores)

    key = jax.random.PRNGKey(0)
    k1, k2, k3, k4 = jax.random.split(key, 4)
    drug_cnn = jax.random.normal(k1, (B, D), dtype=jnp.float32)
    drug_kg = jax.random.normal(k2, (B, D), dtype=jnp.float32)

    # Deterministic Linear(2D -> D) parameters (torch-style (out, in) layout).
    bound = 1.0 / np.sqrt(2 * D)
    weight = jax.random.uniform(k3, (D, 2 * D), dtype=jnp.float32,
                                minval=-bound, maxval=bound)
    bias = jax.random.uniform(k4, (D,), dtype=jnp.float32,
                              minval=-bound, maxval=bound)

    out_a, out_b = simple_unit(drug_cnn, drug_kg, weight, bias)
    out_a = jax.block_until_ready(out_a)
    out_b = jax.block_until_ready(out_b)

    # Reference: plain JAX mirror of the torch forward.
    features = jnp.concatenate([drug_cnn, drug_kg], axis=1)
    ref = features @ weight.T + bias
    np.testing.assert_allclose(np.asarray(out_a), np.asarray(ref),
                               rtol=1e-4, atol=1e-4)
    np.testing.assert_allclose(np.asarray(out_b), np.asarray(ref),
                               rtol=1e-4, atol=1e-4)

    print("KERNEL_OK")
</pallas_src>

<mosaic_0001>
module attributes {stable_mosaic.version = 11 : i64} {
  func.func @_simple_unit_kernel(%arg0: i32, %arg1: i32, %arg2: memref<8x128xf32, #tpu.memory_space<vmem>>, %arg3: memref<8x128xf32, #tpu.memory_space<vmem>>, %arg4: memref<128x256xf32, #tpu.memory_space<vmem>>, %arg5: memref<1x128xf32, #tpu.memory_space<vmem>>, %arg6: memref<8x128xf32, #tpu.memory_space<vmem>>) attributes {dimension_semantics = [#tpu.dimension_semantics<parallel>, #tpu.dimension_semantics<parallel>], iteration_bounds = array<i64: 1, 2>, scalar_prefetch = 0 : i64, scratch_operands = 0 : i64, tpu.core_type = #tpu.core_type<tc>, window_params = [{transform_indices = @transform_0, window_bounds = array<i64: 8, 128>}, {transform_indices = @transform_1, window_bounds = array<i64: 8, 128>}, {transform_indices = @transform_2, window_bounds = array<i64: 128, 256>}, {transform_indices = @transform_3, window_bounds = array<i64: 1, 128>}, {transform_indices = @transform_4, window_bounds = array<i64: 8, 128>}]} {
    %c0 = arith.constant 0 : index
    %c0_0 = arith.constant 0 : index
    %0 = vector.load %arg2[%c0, %c0_0] : memref<8x128xf32, #tpu.memory_space<vmem>>, vector<8x128xf32>
    %c0_1 = arith.constant 0 : index
    %c0_2 = arith.constant 0 : index
    %1 = vector.load %arg3[%c0_1, %c0_2] : memref<8x128xf32, #tpu.memory_space<vmem>>, vector<8x128xf32>
    %2 = tpu.concatenate %0, %1 in 1 : vector<8x128xf32>, vector<8x128xf32> -> vector<8x256xf32>
    %c0_3 = arith.constant 0 : index
    %c0_4 = arith.constant 0 : index
    %3 = vector.load %arg4[%c0_3, %c0_4] : memref<128x256xf32, #tpu.memory_space<vmem>>, vector<128x256xf32>
    %cst = arith.constant dense<0.000000e+00> : vector<8x128xf32>
    %4 = tpu.matmul %2, %3, %cst {dimension_numbers = #tpu.dot_dimension_numbers<[1], [1], [0], [0], [0, 0, 1, 0], [], []>} : vector<8x256xf32>, vector<128x256xf32>, vector<8x128xf32> -> vector<8x128xf32>
    %c0_5 = arith.constant 0 : index
    %c0_6 = arith.constant 0 : index
    %5 = vector.load %arg5[%c0_5, %c0_6] : memref<1x128xf32, #tpu.memory_space<vmem>>, vector<1x128xf32>
    %6 = vector.broadcast %5 : vector<1x128xf32> to vector<8x128xf32>
    %7 = arith.addf %4, %6 : vector<8x128xf32>
    %c0_7 = arith.constant 0 : index
    %c0_8 = arith.constant 0 : index
    %8 = vector.load %arg6[%c0_7, %c0_8] : memref<8x128xf32, #tpu.memory_space<vmem>>, vector<8x128xf32>
    tpu.vector_store %arg6[%c0_7, %c0_8], %7 {strides = array<i32>} : memref<8x128xf32, #tpu.memory_space<vmem>>, vector<8x128xf32>,
    return
  }
  func.func @transform_0(%arg0: i32, %arg1: i32) -> (i32, i32) {
    %c0_i32 = arith.constant 0 : i32
    %c0_i32_0 = arith.constant 0 : i32
    return %arg1, %c0_i32 : i32, i32
  }
  func.func @transform_1(%arg0: i32, %arg1: i32) -> (i32, i32) {
    %c0_i32 = arith.constant 0 : i32
    %c0_i32_0 = arith.constant 0 : i32
    return %arg1, %c0_i32 : i32, i32
  }
  func.func @transform_2(%arg0: i32, %arg1: i32) -> (i32, i32) {
    %c0_i32 = arith.constant 0 : i32
    %c0_i32_0 = arith.constant 0 : i32
    return %arg0, %c0_i32 : i32, i32
  }
  func.func @transform_3(%arg0: i32, %arg1: i32) -> (i32, i32) {
    %c0_i32 = arith.constant 0 : i32
    %c0_i32_0 = arith.constant 0 : i32
    return %c0_i32, %arg0 : i32, i32
  }
  func.func @transform_4(%arg0: i32, %arg1: i32) -> (i32, i32) {
    %c0_i32 = arith.constant 0 : i32
    return %arg1, %arg0 : i32, i32
  }
}

</mosaic_0001>

<llo_original>
// kernel: tpu_custom_call.1
$region0: #{tpu_custom_call.1}
  #allocation0 [shape = 'u32[]', space=smem, size = 0x4, offset = 0x4, fixed_abs, tag = 'smem constant byte address 0x4 - core index']
  #allocation1 [shape = 'u32[144,128]{1,0:T(1,128)}', space=vmem, size = 0x12000, scoped, tag = 'internal scratch']
  %s0 = inlined_call_operand.hbm [shape: f32[16,128], index: 0, kind: input, shape index: {}]
  %s1 = inlined_call_operand.hbm [shape: f32[16,128], index: 1, kind: input, shape index: {}]
  %s2 = inlined_call_operand.hbm [shape: f32[128,256], index: 2, kind: input, shape index: {}]
  %s3 = inlined_call_operand.vmem [shape: f32[1,128], index: 3, kind: input, shape index: {}]
  %s4 = inlined_call_operand.hbm [shape: f32[16,128], index: 4, kind: output, shape index: {}]
  %s5 = sld [smem:[#allocation0]]
  $region61: #{tpu_custom_call.1} parent=0
    _
  %s7 = ssub.s32 1, %s5
  %s8 = scalar_select 0, %s7, %s5
  $region1: #{tpu_custom_call.1} parent=0
    #allocation2 [shape = 'u8[8192]{0}', space=vmem, size = 0x2000, scoped, tag = 'input window, operand 0']
    #allocation3 [shape = 's32[2]{0}', space=sflag, size = 0x8, scoped, tag = 'scoped memory for tpu_custom_call.1']
    #allocation4 [shape = 's32[2]{0}', space=sflag, size = 0x8, scoped, tag = 'scoped memory for tpu_custom_call.1']
    #allocation5 [shape = 'u8[8192]{0}', space=vmem, size = 0x2000, scoped, tag = 'input window, operand 1']
    #allocation6 [shape = 's32[2]{0}', space=sflag, size = 0x8, scoped, tag = 'scoped memory for tpu_custom_call.1']
    #allocation7 [shape = 'u8[131072]{0}', space=vmem, size = 0x20000, scoped, tag = 'input window, operand 2, single buffered']
    #allocation8 [shape = 'u8[8192]{0}', space=vmem, size = 0x2000, scoped, tag = 'output window, operand 0']
    %9 = vsyncpa [#allocation3], 0
    %s10 = scalar_lea.sflag [#allocation3], 1
    %11 = vsyncpa %s10, 0
    %12 = vsyncpa [#allocation6], 0
    %s13 = scalar_lea.sflag [#allocation6], 1
    %14 = vsyncpa %s13, 0
    %15 = vsyncpa [#allocation4], 0
    %s16 = scalar_lea.sflag [#allocation4], 1
    %17 = vsyncpa %s16, 0
    loop: start=0, step=1, limit=4
    $region2: #{tpu_custom_call.1} parent=1 // loop_pre_header
      _
    $region3: #{tpu_custom_call.1} parent=1 // loop_header
      %s19 = sphi 0, %s23
      %p20 = scmp.ge.s32.totalorder %s19, 4
      %s26 = sphi 0, %s38
      %s27 = sphi 0, %s34
      %s28 = sphi 0, %s26
      %s29 = sphi 0, %s27
      %s30 = sphi 0, %s28
      %s31 = sphi 0, %s29
      %s41 = sphi 0, %s43
      %s44 = sphi 0, %s41
      %s45 = sphi 0, %s44
      %s61 = sphi 0, %s45
      %s67 = sphi 0, %s69
      %s70 = sphi 0, %s67
      %s71 = sphi 0, %s70
      %s87 = sphi 0, %s71
      %s93 = sphi 0, %s95
      %s96 = sphi 0, %s93
      %s97 = sphi 0, %s96
      %s113 = sphi 0, %s97
      %s119 = sphi 0, %s121
      %s122 = sphi 0, %s119
      %s123 = sphi 0, %s122
      %s139 = sphi 0, %s123
      %s147 = sphi 0, %s149
      %s150 = sphi 0, %s147
      %s151 = sphi 0, %s150
      %s167 = sphi 0, %s151
    $region4: #{tpu_custom_call.1} parent=1 // loop_header_branch
      %22 = sbr.rel (%p20) target = $region8
    $region5: #{tpu_custom_call.1} parent=1 // loop_body
      %s24 = ssub.s32 %s19, 1
      %s25 = ssub.s32 %s19, 2
      %s32 = sadd.s32 1, %s27
      %p33 = scmp.ge.s32.totalorder %s32, 2
      %s34 = scalar_select %p33, 0, %s32
      %s35 = sadd.s32 1, %s26
      %s36 = scalar_select %p33, %s35, %s26
      %p37 = scmp.ge.s32.totalorder %s36, 1
      %s38 = scalar_select %p37, 0, %s36
      %s39 = ssub.s32 %s27, %s34
      %p40 = scmp.eq.s32.totalorder %s39, 0
      %s42 = sadd.s32 %s41, 1
      %s43 = scalar_select %p40, %s41, %s42
      %p46 = pneg %p40
      %p47 = scmp.eq.s32.totalorder %s19, 1
      %p48 = por %p46, %p47
      %p49 = scmp.ne.s32.totalorder %s41, %s44
      %p50 = scmp.eq.s32.totalorder %s19, 0
      %p51 = por %p49, %p50
      %p52 = scmp.ne.s32.totalorder %s41, %s44
      %p53 = scmp.eq.s32.totalorder %s24, 1
      %p54 = por %p52, %p53
      %p55 = scmp.ne.s32.totalorder %s44, %s45
      %p56 = scmp.eq.s32.totalorder %s24, 0
      %p57 = por %p55, %p56
      %p58 = scmp.ne.s32.totalorder %s44, %s45
      %p59 = scmp.eq.s32.totalorder %s25, 1
      %p60 = por %p58, %p59
      %p62 = scmp.ne.s32.totalorder %s45, %s61
      %p63 = scmp.eq.s32.totalorder %s25, 0
      %p64 = por %p62, %p63
      %s65 = ssub.s32 %s27, %s34
      %p66 = scmp.eq.s32.totalorder %s65, 0
      %s68 = sadd.s32 %s67, 1
      %s69 = scalar_select %p66, %s67, %s68
      %p72 = pneg %p66
      %p73 = scmp.eq.s32.totalorder %s19, 1
      %p74 = por %p72, %p73
      %p75 = scmp.ne.s32.totalorder %s67, %s70
      %p76 = scmp.eq.s32.totalorder %s19, 0
      %p77 = por %p75, %p76
      %p78 = scmp.ne.s32.totalorder %s67, %s70
      %p79 = scmp.eq.s32.totalorder %s24, 1
      %p80 = por %p78, %p79
      %p81 = scmp.ne.s32.totalorder %s70, %s71
      %p82 = scmp.eq.s32.totalorder %s24, 0
      %p83 = por %p81, %p82
      %p84 = scmp.ne.s32.totalorder %s70, %s71
      %p85 = scmp.eq.s32.totalorder %s25, 1
      %p86 = por %p84, %p85
      %p88 = scmp.ne.s32.totalorder %s71, %s87
      %p89 = scmp.eq.s32.totalorder %s25, 0
      %p90 = por %p88, %p89
      %s91 = ssub.s32 %s26, %s38
      %p92 = scmp.eq.s32.totalorder %s91, 0
      %s94 = sadd.s32 %s93, 1
      %s95 = scalar_select %p92, %s93, %s94
      %p98 = pneg %p92
      %p99 = scmp.eq.s32.totalorder %s19, 1
      %p100 = por %p98, %p99
      %p101 = scmp.ne.s32.totalorder %s93, %s96
      %p102 = scmp.eq.s32.totalorder %s19, 0
      %p103 = por %p101, %p102
      %p104 = scmp.ne.s32.totalorder %s93, %s96
      %p105 = scmp.eq.s32.totalorder %s24, 1
      %p106 = por %p104, %p105
      %p107 = scmp.ne.s32.totalorder %s96, %s97
      %p108 = scmp.eq.s32.totalorder %s24, 0
      %p109 = por %p107, %p108
      %p110 = scmp.ne.s32.totalorder %s96, %s97
      %p111 = scmp.eq.s32.totalorder %s25, 1
      %p112 = por %p110, %p111
      %p114 = scmp.ne.s32.totalorder %s97, %s113
      %p115 = scmp.eq.s32.totalorder %s25, 0
      %p116 = por %p114, %p115
      %s117 = ssub.s32 %s26, %s38
      %p118 = scmp.eq.s32.totalorder %s117, 0
      %s120 = sadd.s32 %s119, 1
      %s121 = scalar_select %p118, %s119, %s120
      %p124 = pneg %p118
      %p125 = scmp.eq.s32.totalorder %s19, 1
      %p126 = por %p124, %p125
      %p127 = scmp.ne.s32.totalorder %s119, %s122
      %p128 = scmp.eq.s32.totalorder %s19, 0
      %p129 = por %p127, %p128
      %p130 = scmp.ne.s32.totalorder %s119, %s122
      %p131 = scmp.eq.s32.totalorder %s24, 1
      %p132 = por %p130, %p131
      %p133 = scmp.ne.s32.totalorder %s122, %s123
      %p134 = scmp.eq.s32.totalorder %s24, 0
      %p135 = por %p133, %p134
      %p136 = scmp.ne.s32.totalorder %s122, %s123
      %p137 = scmp.eq.s32.totalorder %s25, 1
      %p138 = por %p136, %p137
      %p140 = scmp.ne.s32.totalorder %s123, %s139
      %p141 = scmp.eq.s32.totalorder %s25, 0
      %p142 = por %p140, %p141
      %s143 = ssub.s32 %s27, %s34
      %s144 = ssub.s32 %s26, %s38
      %s145 = sor.u32 %s143, %s144
      %p146 = scmp.eq.s32.totalorder %s145, 0
      %s148 = sadd.s32 %s147, 1
      %s149 = scalar_select %p146, %s147, %s148
      %p152 = pneg %p146
      %p153 = scmp.eq.s32.totalorder %s19, 1
      %p154 = por %p152, %p153
      %p155 = scmp.ne.s32.totalorder %s147, %s150
      %p156 = scmp.eq.s32.totalorder %s19, 0
      %p157 = por %p155, %p156
      %p158 = scmp.ne.s32.totalorder %s147, %s150
      %p159 = scmp.eq.s32.totalorder %s24, 1
      %p160 = por %p158, %p159
      %p161 = scmp.ne.s32.totalorder %s150, %s151
      %p162 = scmp.eq.s32.totalorder %s24, 0
      %p163 = por %p161, %p162
      %p164 = scmp.ne.s32.totalorder %s150, %s151
      %p165 = scmp.eq.s32.totalorder %s25, 1
      %p166 = por %p164, %p165
      %p168 = scmp.ne.s32.totalorder %s151, %s167
      %p169 = scmp.eq.s32.totalorder %s25, 0
      %p170 = por %p168, %p169
      %p171 = scmp.le.s32.totalorder 1, %s19
      %p172 = scmp.lt.s32.totalorder %s19, 3
      %p173 = pnand %p171, %p172
      %p174 = pneg %p173
      // Predicated region
      $region9: #{tpu_custom_call.1} parent=5 // pred_check
        _
      $region10: #{tpu_custom_call.1} parent=5 // pred_check_branch
        %176 = sbr.rel (%p173) target = $region12
      $region11: #{tpu_custom_call.1} parent=5 // pred_region
        %s177 = ssub.s32 %s19, 1
        // Predicated region
        $region13: #{tpu_custom_call.1} parent=11 // pred_check
          %p178 = pneg %p109
        $region14: #{tpu_custom_call.1} parent=11 // pred_check_branch
          %180 = sbr.rel (%p178) target = $region16
        $region15: #{tpu_custom_call.1} parent=11 // pred_region
          %s181 = smul.u32 16, %s28
          %s183 = ssub.s32 4096, 4096
          %184 = vsyncadd [#allocation6], %s183
          %s185 = smul.addr %s181, 2
          %s186 = smul.addr %s185, 128
          %s187 = scalar_lea.hbm %s2, %s186
          %s188 = sshll.u32 [#allocation7], 4
          %s189 = int_to_ptr.vmem [resolvable:$true] %s188
          %194 = dma.hbm_to_vmem [thread:$0]  %s187, 4096, %s189, [#allocation6], 256, 256, 16
        $region16: #{tpu_custom_call.1} parent=11 // pred_fallthru
          _
        // Predicated region
        $region17: #{tpu_custom_call.1} parent=11 // pred_check
          %p195 = pneg %p135
        $region18: #{tpu_custom_call.1} parent=11 // pred_check_branch
          %197 = sbr.rel (%p195) target = $region20
        $region19: #{tpu_custom_call.1} parent=11 // pred_region
          %p198 = scmp.lt.s32.totalorder %s28, 0
          %s199 = scalar_select %p198, %s28, 0
          %s200 = scalar_lea.vmem %s3, %s199
        $region20: #{tpu_custom_call.1} parent=11 // pred_fallthru
          _
      $region12: #{tpu_custom_call.1} parent=5 // pred_fallthru
        _
      %p201 = scmp.lt.s32.totalorder %s19, 2
      // Predicated region
      $region21: #{tpu_custom_call.1} parent=5 // pred_check
        %p202 = pneg %p201
      $region22: #{tpu_custom_call.1} parent=5 // pred_check_branch
        %204 = sbr.rel (%p202) target = $region24
      $region23: #{tpu_custom_call.1} parent=5 // pred_region
        // Predicated region
        $region25: #{tpu_custom_call.1} parent=23 // pred_check
          %p205 = pneg %p51
        $region26: #{tpu_custom_call.1} parent=23 // pred_check_branch
          %207 = sbr.rel (%p205) target = $region28
        $region27: #{tpu_custom_call.1} parent=23 // pred_region
          %s208 = sand.u32 %s41, 1
          %s209 = scalar_lea.sflag [#allocation3], %s208
          %s210 = sand.u32 %s41, 1
          %s211 = smul.addr %s210, 8
          %s212 = scalar_lea.vmem [#allocation2], %s211
          %s214 = ssub.s32 128, 128
          %215 = vsyncadd %s209, %s214
          %s216 = smul.addr %s27, 128
          %s217 = scalar_lea.hbm %s0, %s216
          %s219 = sshll.u32 %s212, 4
          %s220 = int_to_ptr.vmem [resolvable:$true] %s219
          %222 = dma.hbm_to_vmem [thread:$0]  %s217, 128, %s220, %s209
        $region28: #{tpu_custom_call.1} parent=23 // pred_fallthru
          _
        // Predicated region
        $region29: #{tpu_custom_call.1} parent=23 // pred_check
          %p223 = pneg %p77
        $region30: #{tpu_custom_call.1} parent=23 // pred_check_branch
          %225 = sbr.rel (%p223) target = $region32
        $region31: #{tpu_custom_call.1} parent=23 // pred_region
          %s226 = sand.u32 %s19, 1
          %s227 = scalar_lea.sflag [#allocation6], %s226
          %s228 = sand.u32 %s67, 1
          %s229 = smul.addr %s228, 8
          %s230 = scalar_lea.vmem [#allocation5], %s229
          %s232 = ssub.s32 128, 128
          %233 = vsyncadd %s227, %s232
          %s234 = smul.addr %s27, 128
          %s235 = scalar_lea.hbm %s1, %s234
          %s237 = sshll.u32 %s230, 4
          %s238 = int_to_ptr.vmem [resolvable:$true] %s237
          %240 = dma.hbm_to_vmem [thread:$0]  %s235, 128, %s238, %s227
        $region32: #{tpu_custom_call.1} parent=23 // pred_fallthru
          _
      $region24: #{tpu_custom_call.1} parent=5 // pred_fallthru
        _
      %p241 = scmp.le.s32.totalorder 1, %s19
      %p242 = scmp.lt.s32.totalorder %s19, 3
      %p243 = pnand %p241, %p242
      %p244 = pneg %p243
      // Predicated region
      $region33: #{tpu_custom_call.1} parent=5 // pred_check
        _
      $region34: #{tpu_custom_call.1} parent=5 // pred_check_branch
        %246 = sbr.rel (%p243) target = $region36
      $region35: #{tpu_custom_call.1} parent=5 // pred_region
        %s247 = ssub.s32 %s19, 1
        %s248 = sand.u32 %s44, 1
        %s249 = scalar_lea.sflag [#allocation3], %s248
        %s250 = sand.u32 %s44, 1
        %s251 = smul.addr %s250, 8
        %s252 = scalar_lea.vmem [#allocation2], %s251
        // Predicated region
        $region37: #{tpu_custom_call.1} parent=35 // pred_check
          %p253 = pneg %p57
        $region38: #{tpu_custom_call.1} parent=35 // pred_check_branch
          %255 = sbr.rel (%p253) target = $region40
        $region39: #{tpu_custom_call.1} parent=35 // pred_region
          %256 = dma.done %s249, 128
        $region40: #{tpu_custom_call.1} parent=35 // pred_fallthru
          _
        %s257 = sand.u32 %s24, 1
        %s258 = scalar_lea.sflag [#allocation6], %s257
        %s259 = sand.u32 %s70, 1
        %s260 = smul.addr %s259, 8
        %s261 = scalar_lea.vmem [#allocation5], %s260
        // Predicated region
        $region41: #{tpu_custom_call.1} parent=35 // pred_check
          %p262 = pneg %p83
        $region42: #{tpu_custom_call.1} parent=35 // pred_check_branch
          %264 = sbr.rel (%p262) target = $region44
        $region43: #{tpu_custom_call.1} parent=35 // pred_region
          %265 = dma.done %s258, 128
        $region44: #{tpu_custom_call.1} parent=35 // pred_fallthru
          _
        // Predicated region
        $region45: #{tpu_custom_call.1} parent=35 // pred_check
          %p266 = pneg %p109
        $region46: #{tpu_custom_call.1} parent=35 // pred_check_branch
          %268 = sbr.rel (%p266) target = $region48
        $region47: #{tpu_custom_call.1} parent=35 // pred_region
          %269 = dma.done [#allocation6], 4096
        $region48: #{tpu_custom_call.1} parent=35 // pred_fallthru
          _
        %s270 = sand.u32 %s44, 1
        %s271 = scalar_lea.sflag [#allocation3], %s270
        %s272 = sand.u32 %s44, 1
        %s273 = smul.addr %s272, 8
        %s274 = scalar_lea.vmem [#allocation2], %s273
        %p275 = pneg %p57
        %p276 = pneg %p54
        %s277 = sand.u32 %s24, 1
        %s278 = scalar_lea.sflag [#allocation6], %s277
        %s279 = sand.u32 %s70, 1
        %s280 = smul.addr %s279, 8
        %s281 = scalar_lea.vmem [#allocation5], %s280
        %p282 = pneg %p83
        %p283 = pneg %p80
        %p284 = pneg %p109
        %p285 = pneg %p106
        %p286 = scmp.lt.s32.totalorder %s28, 0
        %s287 = scalar_select %p286, %s28, 0
        %s288 = scalar_lea.vmem %s3, %s287
        %p289 = pneg %p135
        %p290 = pneg %p132
        %p291 = pneg %p163
        %p292 = pneg %p160
        %s293 = sand.u32 %s150, 1
        %s294 = scalar_lea.sflag [#allocation4], %s293
        %s295 = sand.u32 %s150, 1
        %s296 = smul.addr %s295, 8
        %s297 = scalar_lea.vmem [#allocation8], %s296
        %s298 = smul.u32 16, %s28
        %p299 = scmp.lt.s32.totalorder %s28, 0
        %s300 = scalar_select %p299, %s28, 0
        %s301 = scalar_lea.vmem %s3, %s300
        %v302 = vld [vmem:[%s252] sm:$0xff]
        %v303 = vld [vmem:[%s261] sm:$0xff]
        %v304 = vld [vmem:[#allocation7] sm:$0xff]
        %v305 = vld [vmem:[#allocation7 + $0x8] sm:$0xff]
        %v306 = vld [vmem:[#allocation7 + $0x10] sm:$0xff]
        %v307 = vld [vmem:[#allocation7 + $0x18] sm:$0xff]
        %v308 = vld [vmem:[#allocation7 + $0x20] sm:$0xff]
        %v309 = vld [vmem:[#allocation7 + $0x28] sm:$0xff]
        %v310 = vld [vmem:[#allocation7 + $0x30] sm:$0xff]
        %v311 = vld [vmem:[#allocation7 + $0x38] sm:$0xff]
        %v312 = vld [vmem:[#allocation7 + $0x40] sm:$0xff]
        %v313 = vld [vmem:[#allocation7 + $0x48] sm:$0xff]
        %v314 = vld [vmem:[#allocation7 + $0x50] sm:$0xff]
        %v315 = vld [vmem:[#allocation7 + $0x58] sm:$0xff]
        %v316 = vld [vmem:[#allocation7 + $0x60] sm:$0xff]
        %v317 = vld [vmem:[#allocation7 + $0x68] sm:$0xff]
        %v318 = vld [vmem:[#allocation7 + $0x70] sm:$0xff]
        %v319 = vld [vmem:[#allocation7 + $0x78] sm:$0xff]
        %v320 = vld [vmem:[#allocation7 + $0x80] sm:$0xff]
        %v321 = vld [vmem:[#allocation7 + $0x88] sm:$0xff]
        %v322 = vld [vmem:[#allocation7 + $0x90] sm:$0xff]
        %v323 = vld [vmem:[#allocation7 + $0x98] sm:$0xff]
        %v324 = vld [vmem:[#allocation7 + $0xa0] sm:$0xff]
        %v325 = vld [vmem:[#allocation7 + $0xa8] sm:$0xff]
        %v326 = vld [vmem:[#allocation7 + $0xb0] sm:$0xff]
        %v327 = vld [vmem:[#allocation7 + $0xb8] sm:$0xff]
        %v328 = vld [vmem:[#allocation7 + $0xc0] sm:$0xff]
        %v329 = vld [vmem:[#allocation7 + $0xc8] sm:$0xff]
        %v330 = vld [vmem:[#allocation7 + $0xd0] sm:$0xff]
        %v331 = vld [vmem:[#allocation7 + $0xd8] sm:$0xff]
        %v332 = vld [vmem:[#allocation7 + $0xe0] sm:$0xff]
        %v333 = vld [vmem:[#allocation7 + $0xe8] sm:$0xff]
        %v334 = vld [vmem:[#allocation7 + $0xf0] sm:$0xff]
        %v335 = vld [vmem:[#allocation7 + $0xf8] sm:$0xff]
        %v336 = vld [vmem:[%s301] sm:$0x1]
        %v338 = vlaneseq
        %v339 = vshrl.u32 %v338, 7
        %v340 = vsub.s32 0, %v339
        %v341 = vrot.slane %v336, %v340
        %343 = vmatprep.subr.mxu0 %v305
        %344 = vmatpush1.xpose.msra.mxu0 %v304
        %345 = vmatprep.subr.mxu0 %v307
        %346 = vmatpush1.xpose.msra.mxu0 %v306
        %347 = vmatprep.subr.mxu0 %v309
        %348 = vmatpush1.xpose.msra.mxu0 %v308
        %349 = vmatprep.subr.mxu0 %v311
        %350 = vmatpush1.xpose.msra.mxu0 %v310
        %351 = vmatprep.subr.mxu0 %v313
        %352 = vmatpush1.xpose.msra.mxu0 %v312
        %353 = vmatprep.subr.mxu0 %v315
        %354 = vmatpush1.xpose.msra.mxu0 %v314
        %355 = vmatprep.subr.mxu0 %v317
        %356 = vmatpush1.xpose.msra.mxu0 %v316
        %357 = vmatprep.subr.mxu0 %v319
        %358 = vmatpush1.xpose.msra.mxu0 %v318
        %359 = vmatprep.subr.mxu0 %v321
        %360 = vmatpush1.xpose.msra.mxu0 %v320
        %361 = vmatprep.subr.mxu0 %v323
        %362 = vmatpush1.xpose.msra.mxu0 %v322
        %363 = vmatprep.subr.mxu0 %v325
        %364 = vmatpush1.xpose.msra.mxu0 %v324
        %365 = vmatprep.subr.mxu0 %v327
        %366 = vmatpush1.xpose.msra.mxu0 %v326
        %367 = vmatprep.subr.mxu0 %v329
        %368 = vmatpush1.xpose.msra.mxu0 %v328
        %369 = vmatprep.subr.mxu0 %v331
        %370 = vmatpush1.xpose.msra.mxu0 %v330
        %371 = vmatprep.subr.mxu0 %v333
        %372 = vmatpush1.xpose.msra.mxu0 %v332
        %373 = vmatprep.subr.mxu0 %v335
        %374 = vmatpush1.xpose.msra.mxu0 %v334
        %375 = vmatprep.subr.mxu0 0.0
        %376 = vmatpush1.xpose.msra.mxu0 0.0
        %377 = vmatprep.subr.mxu0 0.0
        %378 = vmatpush1.xpose.msra.mxu0 0.0
        %379 = vmatprep.subr.mxu0 0.0
        %380 = vmatpush1.xpose.msra.mxu0 0.0
        %381 = vmatprep.subr.mxu0 0.0
        %382 = vmatpush1.xpose.msra.mxu0 0.0
        %383 = vmatprep.subr.mxu0 0.0
        %384 = vmatpush1.xpose.msra.mxu0 0.0
        %385 = vmatprep.subr.mxu0 0.0
        %386 = vmatpush1.xpose.msra.mxu0 0.0
        %387 = vmatprep.subr.mxu0 0.0
        %388 = vmatpush1.xpose.msra.mxu0 0.0
        %389 = vmatprep.subr.mxu0 0.0
        %390 = vmatpush1.xpose.msra.mxu0 0.0
        %391 = vmatprep.subr.mxu0 0.0
        %392 = vmatpush1.xpose.msra.mxu0 0.0
        %393 = vmatprep.subr.mxu0 0.0
        %394 = vmatpush1.xpose.msra.mxu0 0.0
        %395 = vmatprep.subr.mxu0 0.0
        %396 = vmatpush1.xpose.msra.mxu0 0.0
        %397 = vmatprep.subr.mxu0 0.0
        %398 = vmatpush1.xpose.msra.mxu0 0.0
        %399 = vmatprep.subr.mxu0 0.0
        %400 = vmatpush1.xpose.msra.mxu0 0.0
        %401 = vmatprep.subr.mxu0 0.0
        %402 = vmatpush1.xpose.msra.mxu0 0.0
        %403 = vmatprep.subr.mxu0 0.0
        %404 = vmatpush1.xpose.msra.mxu0 0.0
        %405 = vmatprep.subr.mxu0 0.0
        %406 = vmatpush1.xpose.msra.mxu0 0.0
        %407 = vmatprep.mubr.f32.mxu0 %v303
        %408 = vmatmul.mubr.f32.gmra.mrb[0].mxu0 %v302
        %v409 = vpop.f32.mrb[0].mxu0
        %v410 = vadd.f32 %v341, %v409
        %v411 = vpop.f32.mrb[0].mxu0
        %412 = vdwg.mxu0
        %413 = vst [vmem:[%s297] sm:$0xff] %v410
        %s414 = sand.u32 %s150, 1
        %s415 = scalar_lea.sflag [#allocation4], %s414
        %s416 = sand.u32 %s150, 1
        %s417 = smul.addr %s416, 8
        %s418 = scalar_lea.vmem [#allocation8], %s417
        // Predicated region
        $region49: #{tpu_custom_call.1} parent=35 // pred_check
          %p419 = pneg %p160
        $region50: #{tpu_custom_call.1} parent=35 // pred_check_branch
          %421 = sbr.rel (%p419) target = $region52
        $region51: #{tpu_custom_call.1} parent=35 // pred_region
          %s423 = ssub.s32 128, 128
          %424 = vsyncadd %s415, %s423
          %s425 = sadd.s32 %s28, %s29
          %s426 = smul.addr %s425, 128
          %s427 = scalar_lea.hbm %s4, %s426
          %s429 = sshll.u32 %s418, 4
          %s430 = int_to_ptr.vmem [resolvable:$true] %s429
          %432 = dma.vmem_to_hbm [thread:$0]  %s430, 128, %s427, %s415
        $region52: #{tpu_custom_call.1} parent=35 // pred_fallthru
          _
      $region36: #{tpu_custom_call.1} parent=5 // pred_fallthru
        _
      %p433 = scmp.le.s32.totalorder 2, %s19
      // Predicated region
      $region53: #{tpu_custom_call.1} parent=5 // pred_check
        %p434 = pneg %p433
      $region54: #{tpu_custom_call.1} parent=5 // pred_check_branch
        %436 = sbr.rel (%p434) target = $region56
      $region55: #{tpu_custom_call.1} parent=5 // pred_region
        %s437 = ssub.s32 %s19, 2
        // Predicated region
        $region57: #{tpu_custom_call.1} parent=55 // pred_check
          %p438 = pneg %p166
        $region58: #{tpu_custom_call.1} parent=55 // pred_check_branch
          %440 = sbr.rel (%p438) target = $region60
        $region59: #{tpu_custom_call.1} parent=55 // pred_region
          %s441 = sand.u32 %s151, 1
          %s442 = scalar_lea.sflag [#allocation4], %s441
          %s443 = sand.u32 %s151, 1
          %s444 = smul.addr %s443, 8
          %s445 = scalar_lea.vmem [#allocation8], %s444
          %446 = dma.done %s442, 128
        $region60: #{tpu_custom_call.1} parent=55 // pred_fallthru
          _
      $region56: #{tpu_custom_call.1} parent=5 // pred_fallthru
        _
    $region6: #{tpu_custom_call.1} parent=1 // loop_footer
      %s23 = sadd.s32 1, %s19
    $region7: #{tpu_custom_call.1} parent=1 // loop_footer_branch
      %18 = sbr.rel target = $region3
    $region8: #{tpu_custom_call.1} parent=1 // loop_exit
      _
    %447 = vsyncpa [#allocation3], 1
    %s448 = scalar_lea.sflag [#allocation3], 1
    %449 = vsyncpa %s448, 1
    %450 = vsyncpa [#allocation6], 1
    %s451 = scalar_lea.sflag [#allocation6], 1
    %452 = vsyncpa %s451, 1
    %453 = vsyncpa [#allocation4], 1
    %s454 = scalar_lea.sflag [#allocation4], 1
    %455 = vsyncpa %s454, 1

</llo_original>
